<compile_context>
chip_gen: v7x
topology: tpu7x:2x2x1
jax: 0.10.0
libtpu: 0.0.40
codegen_flags: <defaults>
</compile_context>

<pallas_src>
import functools
import math

import jax
import jax.numpy as jnp
from jax.experimental import pallas as pl
from jax.experimental.pallas import tpu as pltpu


_INV_SQRT2 = 1.0 / math.sqrt(2.0)
_SQRT_2_OVER_PI = math.sqrt(2.0 / math.pi)


def _gelu(x, approximate):
    if approximate:
        # tanh approximation: the transcendental routes to the EUP, whose bundle
        # slot is otherwise idle; the surrounding muls/adds stay in x.dtype.
        return 0.5 * x * (1.0 + jnp.tanh(_SQRT_2_OVER_PI * (x + 0.044715 * (x * x * x))))
    # Exact erf GELU: matches torch.nn.functional.gelu's default numerics.
    return 0.5 * x * (1.0 + jax.lax.erf(x * _INV_SQRT2))


def critic_kernel(x_ref, w1_ref, b1_ref, w2_ref, b2_ref, w3t_ref, b3_ref, q_ref,
                  *, approximate_gelu):
    """One batch tile: q[1, TB] = fc3(gelu(fc2(gelu(fc1(x)))))."""
    wdt = w2_ref.dtype                                   # matmul operand dtype (f32/bf16)
    # GELU in bf16 when weights are bf16 (v6e/v7x bf16 VPU/EUP), f32 otherwise.
    gelu_dt = wdt if wdt == jnp.bfloat16 else jnp.float32

    x = x_ref[...].astype(wdt)                           # [TB, obs+act]

    # fc1: single MXU pass over the packed (concat-folded) weight.
    h = jnp.dot(x, w1_ref[...], preferred_element_type=jnp.float32) + b1_ref[...]
    h = _gelu(h.astype(gelu_dt), approximate_gelu)       # [TB, H]

    # fc2.
    h = jnp.dot(h.astype(wdt), w2_ref[...],
                preferred_element_type=jnp.float32) + b2_ref[...]
    h = _gelu(h.astype(gelu_dt), approximate_gelu)       # [TB, H]

    # Final N=1 layer as VPU multiply + lane reduction (no 1-column MXU pass).
    # Kept in f32: it is only H ops/row and preserves parity with the f32 reference.
    w3_row = w3t_ref[...].astype(jnp.float32)            # [1, H]
    q = jnp.sum(h.astype(jnp.float32) * w3_row, axis=1)  # [TB]
    # Batch on the lane axis -> lane-dense (unmasked) vector store.
    q_ref[...] = (q[None, :] + b3_ref[...]).astype(q_ref.dtype)   # [1, TB]


def _round_up(n, m):
    return ((n + m - 1) // m) * m


def _pad_batch(x, b_pad):
    b = x.shape[0]
    if b_pad == b:
        return x
    return jnp.pad(x, ((0, b_pad - b), (0, 0)))


def _choose_tile(batch, tb, split_for_cores):
    """Batch tile: multiple of 128 for B >= 128 (lane-dense output), multiple of 8
    otherwise; optionally capped so g >= 2 (v7x: both TensorCores get work)."""
    if batch <= 128:
        return _round_up(batch, 8)
    tb = max(128, _round_up(tb, 128))
    if split_for_cores and batch >= 256:
        tb = min(tb, _round_up(pl.cdiv(batch, 2), 128))
    return min(tb, _round_up(batch, 128))


def _resident_spec(shape):
    # Full-array block with a constant index map: DMA'd once, stays in VMEM.
    nd = len(shape)
    return pl.BlockSpec(shape, lambda *_: (0,) * nd)


def _cost(b_pad, d_in, hidden, n_critics, arrays):
    flops = 2 * b_pad * (d_in * hidden + hidden * hidden + hidden) * n_critics
    transcendentals = 2 * b_pad * hidden * n_critics
    bytes_accessed = sum(int(a.size) * a.dtype.itemsize for a in arrays) + n_critics * b_pad * 4
    return pl.CostEstimate(flops=int(flops), transcendentals=int(transcendentals),
                           bytes_accessed=int(bytes_accessed))


def critic_forward(state, action, params, *, tb=512, approximate_gelu=True,
                   split_batch_for_cores=True):
    """Fused Pallas forward for one critic.  Returns q of shape [B, 1].

    approximate_gelu=False with f32 params reproduces torch F.gelu's exact-erf
    default; the True default trades ~1e-3-level numerics for the EUP fast path.
    """
    w1, b1, w2, b2, w3t, b3 = params
    B = state.shape[0]
    d_in = w1.shape[0]
    hidden = w2.shape[0]

    # Wrapper-side concat: ~(obs+act)*4 bytes/row of extra HBM traffic, negligible,
    # and it lets fc1 be a single MXU pass instead of two K<16 micro-matmuls.
    x = jnp.concatenate([state, action], axis=1)          # [B, obs+act]

    tb = _choose_tile(B, tb, split_batch_for_cores)
    b_pad = _round_up(B, tb)
    g = b_pad // tb
    x = _pad_batch(x, b_pad)

    weights = (w1, b1, w2, b2, w3t, b3)
    in_specs = [pl.BlockSpec((tb, d_in), lambda i: (i, 0))] + \
               [_resident_spec(w.shape) for w in weights]
    # Output laid out (1, b_pad): second-to-last block dim (1) equals the full
    # array dim at any g, last dim tb is lane-dense.
    out_spec = pl.BlockSpec((1, tb), lambda i: (0, i))

    q = pl.pallas_call(
        functools.partial(critic_kernel, approximate_gelu=approximate_gelu),
        out_shape=jax.ShapeDtypeStruct((1, b_pad), jnp.float32),
        grid_spec=pltpu.PrefetchScalarGridSpec(
            num_scalar_prefetch=0, grid=(g,),
            in_specs=in_specs, out_specs=out_spec),
        compiler_params=pltpu.CompilerParams(dimension_semantics=("parallel",)),
        cost_estimate=_cost(b_pad, d_in, hidden, 1, (x,) + weights),
    )(x, *weights)
    return q.reshape(b_pad)[:B, None]                      # [B, 1]


def critic_forward_twin(state, action, params_list, *, tb=512, approximate_gelu=True):
    """SAC twin critics (Q1, Q2, ...) fused into a single pallas_call.

    Per-critic parameters are stacked on a leading axis; grid = (n_critics,
    batch_tiles), both axes marked parallel.  The critic axis already provides
    core-level parallelism, so the batch tile is not split further."""
    n = len(params_list)
    w1, b1, w2, b2, w3t, b3 = (jnp.stack(p) for p in zip(*params_list))
    B = state.shape[0]
    d_in = w1.shape[1]
    hidden = w2.shape[1]

    x = jnp.concatenate([state, action], axis=1)
    tb = _choose_tile(B, tb, split_for_cores=False)
    b_pad = _round_up(B, tb)
    g = b_pad // tb
    x = _pad_batch(x, b_pad)

    weights = (w1, b1, w2, b2, w3t, b3)
    in_specs = [pl.BlockSpec((tb, d_in), lambda c, i: (i, 0))] + \
               [pl.BlockSpec((None,) + w.shape[1:], lambda c, i: (c, 0, 0))
                for w in weights]
    out_spec = pl.BlockSpec((None, 1, tb), lambda c, i: (c, 0, i))

    q = pl.pallas_call(
        functools.partial(critic_kernel, approximate_gelu=approximate_gelu),
        out_shape=jax.ShapeDtypeStruct((n, 1, b_pad), jnp.float32),
        grid_spec=pltpu.PrefetchScalarGridSpec(
            num_scalar_prefetch=0, grid=(n, g),
            in_specs=in_specs, out_specs=out_spec),
        compiler_params=pltpu.CompilerParams(
            dimension_semantics=("parallel", "parallel")),
        cost_estimate=_cost(b_pad, d_in, hidden, n, (x,) + weights),
    )(x, *weights)
    q = q.reshape(n, b_pad)[:, :B]
    return tuple(q[c][:, None] for c in range(n))          # n x [B, 1]


def init_critic_params(key, obs_dim, act_dim, hidden_dim=256, param_dtype=jnp.float32):
    """Deterministic init mimicking torch.nn.Linear (uniform +-1/sqrt(fan_in)).

    Layout matches the kernel: packed W1 [obs+act, H]; W2 [H, H]; fc3 stored as
    a row w3t [1, H].  Weights in `param_dtype` (f32 or bf16), biases f32."""
    def linear(k, fan_in, fan_out):
        kw, kb = jax.random.split(k)
        bound = 1.0 / math.sqrt(fan_in)
        w = jax.random.uniform(kw, (fan_in, fan_out), jnp.float32, -bound, bound)
        b = jax.random.uniform(kb, (1, fan_out), jnp.float32, -bound, bound)
        return w, b

    k1, k2, k3 = jax.random.split(key, 3)
    w1, b1 = linear(k1, obs_dim + act_dim, hidden_dim)
    w2, b2 = linear(k2, hidden_dim, hidden_dim)
    w3, b3 = linear(k3, hidden_dim, 1)
    return (w1.astype(param_dtype), b1,
            w2.astype(param_dtype), b2,
            w3.T.astype(param_dtype),            # w3t [1, H]
            b3.reshape(1, 1))


def critic_reference(state, action, params, approximate_gelu=True):
    """Pure-JAX reference with the same dtype/accumulation semantics as the kernel."""
    w1, b1, w2, b2, w3t, b3 = params
    wdt = w2.dtype
    gelu_dt = wdt if wdt == jnp.bfloat16 else jnp.float32
    x = jnp.concatenate([state, action], axis=1).astype(wdt)
    h = jnp.dot(x, w1, preferred_element_type=jnp.float32) + b1
    h = _gelu(h.astype(gelu_dt), approximate_gelu)
    h = jnp.dot(h.astype(wdt), w2, preferred_element_type=jnp.float32) + b2
    h = _gelu(h.astype(gelu_dt), approximate_gelu)
    return (jnp.sum(h.astype(jnp.float32) * w3t.astype(jnp.float32),
                    axis=1, keepdims=True) + b3)


if __name__ == "__main__":
    # LunarLanderContinuous-v2: obs_dim=8, act_dim=2, hidden_dim=256.
    obs_dim, act_dim, hidden_dim = 8, 2, 256

    key = jax.random.PRNGKey(0)
    kp1, kp2, ks, ka = jax.random.split(key, 4)
    params_q1 = init_critic_params(kp1, obs_dim, act_dim, hidden_dim, jnp.float32)
    params_q2 = init_critic_params(kp2, obs_dim, act_dim, hidden_dim, jnp.float32)

    # 1) Small batch, f32 params, exact erf GELU: parity with torch F.gelu default.
    b_small = 8
    state = jax.random.normal(ks, (b_small, obs_dim), jnp.float32)
    action = jax.random.normal(ka, (b_small, act_dim), jnp.float32)
    q1 = critic_forward(state, action, params_q1, approximate_gelu=False)
    jax.block_until_ready(q1)
    q1_ref = critic_reference(state, action, params_q1, approximate_gelu=False)
    assert q1.shape == (b_small, 1)
    assert jnp.allclose(q1, q1_ref, atol=1e-4, rtol=1e-4)

    # 2) Training-sized batch (exercises the multi-tile output layout, g >= 2).
    b_train = 256
    state_tr = jax.random.normal(ks, (b_train, obs_dim), jnp.float32)
    action_tr = jax.random.normal(ka, (b_train, act_dim), jnp.float32)
    q_tr = critic_forward(state_tr, action_tr, params_q1)          # default tanh GELU
    jax.block_until_ready(q_tr)
    q_tr_ref = critic_reference(state_tr, action_tr, params_q1, approximate_gelu=True)
    assert q_tr.shape == (b_train, 1)
    assert jnp.allclose(q_tr, q_tr_ref, atol=1e-4, rtol=1e-4)

    # 3) Fast path: bf16 weights (f32 MXU accumulation, bf16 GELU) + tanh GELU.
    params_fast = init_critic_params(kp1, obs_dim, act_dim, hidden_dim, jnp.bfloat16)
    q_fast = critic_forward(state_tr, action_tr, params_fast, approximate_gelu=True)
    jax.block_until_ready(q_fast)
    q_fast_ref = critic_reference(state_tr, action_tr, params_fast, approximate_gelu=True)
    assert jnp.allclose(q_fast, q_fast_ref, atol=2e-2, rtol=2e-2)

    # 4) Fused SAC twin critics (Q1, Q2) in a single pallas_call.
    q1_t, q2_t = critic_forward_twin(state, action, (params_q1, params_q2),
                                     approximate_gelu=False)
    jax.block_until_ready((q1_t, q2_t))
    q2_ref = critic_reference(state, action, params_q2, approximate_gelu=False)
    assert jnp.allclose(q1_t, q1_ref, atol=1e-4, rtol=1e-4)
    assert jnp.allclose(q2_t, q2_ref, atol=1e-4, rtol=1e-4)

    print("KERNEL_OK")
</pallas_src>

<mosaic_0001>
module attributes {stable_mosaic.version = 11 : i64} {
  func.func @critic_kernel(%arg0: i32, %arg1: memref<8x10xf32, #tpu.memory_space<vmem>>, %arg2: memref<10x256xf32, #tpu.memory_space<vmem>>, %arg3: memref<1x256xf32, #tpu.memory_space<vmem>>, %arg4: memref<256x256xf32, #tpu.memory_space<vmem>>, %arg5: memref<1x256xf32, #tpu.memory_space<vmem>>, %arg6: memref<1x256xf32, #tpu.memory_space<vmem>>, %arg7: memref<1x1xf32, #tpu.memory_space<vmem>>, %arg8: memref<1x8xf32, #tpu.memory_space<vmem>>) attributes {dimension_semantics = [#tpu.dimension_semantics<parallel>], iteration_bounds = array<i64: 1>, scalar_prefetch = 0 : i64, scratch_operands = 0 : i64, tpu.core_type = #tpu.core_type<tc>, window_params = [{transform_indices = @transform_0, window_bounds = array<i64: 8, 10>}, {pipeline_mode = #tpu.pipeline_mode<synchronous>, transform_indices = @transform_1, window_bounds = array<i64: 10, 256>}, {pipeline_mode = #tpu.pipeline_mode<synchronous>, transform_indices = @transform_2, window_bounds = array<i64: 1, 256>}, {pipeline_mode = #tpu.pipeline_mode<synchronous>, transform_indices = @transform_3, window_bounds = array<i64: 256, 256>}, {pipeline_mode = #tpu.pipeline_mode<synchronous>, transform_indices = @transform_4, window_bounds = array<i64: 1, 256>}, {pipeline_mode = #tpu.pipeline_mode<synchronous>, transform_indices = @transform_5, window_bounds = array<i64: 1, 256>}, {pipeline_mode = #tpu.pipeline_mode<synchronous>, transform_indices = @transform_6, window_bounds = array<i64: 1, 1>}, {transform_indices = @transform_7, window_bounds = array<i64: 1, 8>}]} {
    %c0 = arith.constant 0 : index
    %c0_0 = arith.constant 0 : index
    %0 = vector.load %arg1[%c0, %c0_0] : memref<8x10xf32, #tpu.memory_space<vmem>>, vector<8x10xf32>
    %c0_1 = arith.constant 0 : index
    %c0_2 = arith.constant 0 : index
    %1 = vector.load %arg2[%c0_1, %c0_2] : memref<10x256xf32, #tpu.memory_space<vmem>>, vector<10x256xf32>
    %cst = arith.constant dense<0.000000e+00> : vector<8x256xf32>
    %2 = tpu.matmul %0, %1, %cst {dimension_numbers = #tpu.dot_dimension_numbers<[1], [0], [0], [1], [0, 0, 1, 1], [], []>} : vector<8x10xf32>, vector<10x256xf32>, vector<8x256xf32> -> vector<8x256xf32>
    %c0_3 = arith.constant 0 : index
    %c0_4 = arith.constant 0 : index
    %3 = vector.load %arg3[%c0_3, %c0_4] : memref<1x256xf32, #tpu.memory_space<vmem>>, vector<1x256xf32>
    %4 = vector.broadcast %3 : vector<1x256xf32> to vector<8x256xf32>
    %5 = arith.addf %2, %4 : vector<8x256xf32>
    %cst_5 = arith.constant 5.000000e-01 : f32
    %6 = vector.broadcast %cst_5 : f32 to vector<8x256xf32>
    %7 = arith.mulf %6, %5 : vector<8x256xf32>
    %cst_6 = arith.constant 0.707106769 : f32
    %8 = vector.broadcast %cst_6 : f32 to vector<8x256xf32>
    %9 = arith.mulf %5, %8 : vector<8x256xf32>
    %10 = math.erf %9 : vector<8x256xf32>
    %cst_7 = arith.constant 1.000000e+00 : f32
    %11 = vector.broadcast %cst_7 : f32 to vector<8x256xf32>
    %12 = arith.addf %11, %10 : vector<8x256xf32>
    %13 = arith.mulf %7, %12 : vector<8x256xf32>
    %c0_8 = arith.constant 0 : index
    %c0_9 = arith.constant 0 : index
    %14 = vector.load %arg4[%c0_8, %c0_9] : memref<256x256xf32, #tpu.memory_space<vmem>>, vector<256x256xf32>
    %cst_10 = arith.constant dense<0.000000e+00> : vector<8x256xf32>
    %15 = tpu.matmul %13, %14, %cst_10 {dimension_numbers = #tpu.dot_dimension_numbers<[1], [0], [0], [1], [0, 0, 1, 1], [], []>} : vector<8x256xf32>, vector<256x256xf32>, vector<8x256xf32> -> vector<8x256xf32>
    %c0_11 = arith.constant 0 : index
    %c0_12 = arith.constant 0 : index
    %16 = vector.load %arg5[%c0_11, %c0_12] : memref<1x256xf32, #tpu.memory_space<vmem>>, vector<1x256xf32>
    %17 = vector.broadcast %16 : vector<1x256xf32> to vector<8x256xf32>
    %18 = arith.addf %15, %17 : vector<8x256xf32>
    %cst_13 = arith.constant 5.000000e-01 : f32
    %19 = vector.broadcast %cst_13 : f32 to vector<8x256xf32>
    %20 = arith.mulf %19, %18 : vector<8x256xf32>
    %cst_14 = arith.constant 0.707106769 : f32
    %21 = vector.broadcast %cst_14 : f32 to vector<8x256xf32>
    %22 = arith.mulf %18, %21 : vector<8x256xf32>
    %23 = math.erf %22 : vector<8x256xf32>
    %cst_15 = arith.constant 1.000000e+00 : f32
    %24 = vector.broadcast %cst_15 : f32 to vector<8x256xf32>
    %25 = arith.addf %24, %23 : vector<8x256xf32>
    %26 = arith.mulf %20, %25 : vector<8x256xf32>
    %c0_16 = arith.constant 0 : index
    %c0_17 = arith.constant 0 : index
    %27 = vector.load %arg6[%c0_16, %c0_17] : memref<1x256xf32, #tpu.memory_space<vmem>>, vector<1x256xf32>
    %28 = vector.broadcast %27 : vector<1x256xf32> to vector<8x256xf32>
    %29 = arith.mulf %26, %28 : vector<8x256xf32>
    %cst_18 = arith.constant dense<0.000000e+00> : vector<8xf32>
    %30 = vector.multi_reduction <add>, %29, %cst_18 [1] : vector<8x256xf32> to vector<8xf32>
    %31 = vector.shape_cast %30 : vector<8xf32> to vector<1x8xf32>
    %c0_19 = arith.constant 0 : index
    %c0_20 = arith.constant 0 : index
    %32 = vector.load %arg7[%c0_19, %c0_20] : memref<1x1xf32, #tpu.memory_space<vmem>>, vector<1x1xf32>
    %33 = vector.broadcast %32 : vector<1x1xf32> to vector<1x8xf32>
    %34 = arith.addf %31, %33 : vector<1x8xf32>
    %c0_21 = arith.constant 0 : index
    %c0_22 = arith.constant 0 : index
    %35 = vector.load %arg8[%c0_21, %c0_22] : memref<1x8xf32, #tpu.memory_space<vmem>>, vector<1x8xf32>
    tpu.vector_store %arg8[%c0_21, %c0_22], %34 {strides = array<i32>} : memref<1x8xf32, #tpu.memory_space<vmem>>, vector<1x8xf32>,
    return
  }
  func.func @transform_0(%arg0: i32) -> (i32, i32) {
    %c0_i32 = arith.constant 0 : i32
    %c0_i32_0 = arith.constant 0 : i32
    return %arg0, %c0_i32 : i32, i32
  }
  func.func @transform_1(%arg0: i32) -> (i32, i32) {
    %c0_i32 = arith.constant 0 : i32
    %c0_i32_0 = arith.constant 0 : i32
    %c0_i32_1 = arith.constant 0 : i32
    return %c0_i32, %c0_i32_0 : i32, i32
  }
  func.func @transform_2(%arg0: i32) -> (i32, i32) {
    %c0_i32 = arith.constant 0 : i32
    %c0_i32_0 = arith.constant 0 : i32
    %c0_i32_1 = arith.constant 0 : i32
    return %c0_i32, %c0_i32_0 : i32, i32
  }
  func.func @transform_3(%arg0: i32) -> (i32, i32) {
    %c0_i32 = arith.constant 0 : i32
    %c0_i32_0 = arith.constant 0 : i32
    %c0_i32_1 = arith.constant 0 : i32
    return %c0_i32, %c0_i32_0 : i32, i32
  }
  func.func @transform_4(%arg0: i32) -> (i32, i32) {
    %c0_i32 = arith.constant 0 : i32
    %c0_i32_0 = arith.constant 0 : i32
    %c0_i32_1 = arith.constant 0 : i32
    return %c0_i32, %c0_i32_0 : i32, i32
  }
  func.func @transform_5(%arg0: i32) -> (i32, i32) {
    %c0_i32 = arith.constant 0 : i32
    %c0_i32_0 = arith.constant 0 : i32
    %c0_i32_1 = arith.constant 0 : i32
    return %c0_i32, %c0_i32_0 : i32, i32
  }
  func.func @transform_6(%arg0: i32) -> (i32, i32) {
    %c0_i32 = arith.constant 0 : i32
    %c0_i32_0 = arith.constant 0 : i32
    %c0_i32_1 = arith.constant 0 : i32
    return %c0_i32, %c0_i32_0 : i32, i32
  }
  func.func @transform_7(%arg0: i32) -> (i32, i32) {
    %c0_i32 = arith.constant 0 : i32
    %c0_i32_0 = arith.constant 0 : i32
    return %c0_i32, %arg0 : i32, i32
  }
}

</mosaic_0001>

<llo_original>
// kernel: tpu_custom_call.1
$region0: #{tpu_custom_call.1}
  #allocation0 [shape = 'u32[]', space=smem, size = 0x4, offset = 0x4, fixed_abs, tag = 'smem constant byte address 0x4 - core index']
  #allocation1 [shape = 'u32[144,128]{1,0:T(1,128)}', space=vmem, size = 0x12000, scoped, tag = 'internal scratch']
  #allocation2 [shape = 'f32[1,1]{1,0:T(1,128)S(1)}', space=vmem, size = 0x200, scoped, tag = 'scoped memory for tpu_custom_call.1']
  %s0 = inlined_call_operand.hbm [shape: f32[8,10], index: 0, kind: input, shape index: {}]
  %s1 = inlined_call_operand.hbm [shape: f32[10,256], index: 1, kind: input, shape index: {}]
  %s2 = inlined_call_operand.vmem [shape: f32[1,256], index: 2, kind: input, shape index: {}]
  %s3 = inlined_call_operand.hbm [shape: f32[256,256], index: 3, kind: input, shape index: {}]
  %s4 = inlined_call_operand.vmem [shape: f32[1,256], index: 4, kind: input, shape index: {}]
  %s5 = inlined_call_operand.vmem [shape: f32[1,256], index: 5, kind: input, shape index: {}]
  %s6 = inlined_call_operand.<no memory space> [shape: f32[1,1], index: 6, kind: input, shape index: {}]
  %s7 = inlined_call_operand.hbm [shape: f32[1,8], index: 7, kind: output, shape index: {}]
  %s8 = sld [smem:[#allocation0]]
  $region50: #{tpu_custom_call.1} parent=0
    _
  %s10 = ssub.s32 1, %s8
  %s11 = scalar_select 0, %s10, %s8
  %v12 = vstv %s6
  %13 = vst [vmem:[#allocation2] sm:$0x1] %v12
  $region1: #{tpu_custom_call.1} parent=0
    #allocation3 [shape = 'u8[4096]{0}', space=vmem, size = 0x1000, scoped, tag = 'input window, operand 0, single buffered']
    #allocation4 [shape = 's32[1]{0}', space=sflag, size = 0x4, scoped, tag = 'scoped memory for tpu_custom_call.1']
    #allocation5 [shape = 's32[1]{0}', space=sflag, size = 0x4, scoped, tag = 'scoped memory for tpu_custom_call.1']
    #allocation6 [shape = 'u8[16384]{0}', space=vmem, size = 0x4000, scoped, tag = 'input window, operand 1, single buffered']
    #allocation7 [shape = 's32[1]{0}', space=sflag, size = 0x4, scoped, tag = 'scoped memory for tpu_custom_call.1']
    #allocation8 [shape = 'u8[262144]{0}', space=vmem, size = 0x40000, scoped, tag = 'input window, operand 3, single buffered']
    #allocation9 [shape = 'u8[512]{0}', space=vmem, size = 0x400, scoped, tag = 'output window, operand 0, single buffered']
    %14 = vsyncpa [#allocation4], 0
    %15 = vsyncpa [#allocation7], 0
    %16 = vsyncpa [#allocation5], 0
    // Predicated region
    $region2: #{tpu_custom_call.1} parent=1 // pred_check
      _
    $region3: #{tpu_custom_call.1} parent=1 // pred_check_branch
      %18 = sbr.rel (0) target = $region5
    $region4: #{tpu_custom_call.1} parent=1 // pred_region
      %s20 = ssub.s32 128, 128
      %21 = vsyncadd [#allocation4], %s20
      %s23 = sshll.u32 [#allocation3], 4
      %s24 = int_to_ptr.vmem [resolvable:$true] %s23
      %26 = dma.hbm_to_vmem [thread:$0]  %s0, 128, %s24, [#allocation4]
    $region5: #{tpu_custom_call.1} parent=1 // pred_fallthru
      _
    // Predicated region
    $region6: #{tpu_custom_call.1} parent=1 // pred_check
      _
    $region7: #{tpu_custom_call.1} parent=1 // pred_check_branch
      %28 = sbr.rel (0) target = $region9
    $region8: #{tpu_custom_call.1} parent=1 // pred_region
      %s30 = ssub.s32 512, 512
      %31 = vsyncadd [#allocation7], %s30
      %s32 = sshll.u32 [#allocation6], 4
      %s33 = int_to_ptr.vmem [resolvable:$true] %s32
      %38 = dma.hbm_to_vmem [thread:$0]  %s1, 512, %s33, [#allocation7], 256, 256, 16
    $region9: #{tpu_custom_call.1} parent=1 // pred_fallthru
      _
    // Predicated region
    $region10: #{tpu_custom_call.1} parent=1 // pred_check
      _
    $region11: #{tpu_custom_call.1} parent=1 // pred_check_branch
      %40 = sbr.rel (0) target = $region13
    $region12: #{tpu_custom_call.1} parent=1 // pred_region
      _
    $region13: #{tpu_custom_call.1} parent=1 // pred_fallthru
      _
    // Predicated region
    $region14: #{tpu_custom_call.1} parent=1 // pred_check
      _
    $region15: #{tpu_custom_call.1} parent=1 // pred_check_branch
      %42 = sbr.rel (0) target = $region17
    $region16: #{tpu_custom_call.1} parent=1 // pred_region
      %s44 = ssub.s32 8192, 8192
      %45 = vsyncadd [#allocation7], %s44
      %s46 = sshll.u32 [#allocation8], 4
      %s47 = int_to_ptr.vmem [resolvable:$true] %s46
      %52 = dma.hbm_to_vmem [thread:$0]  %s3, 8192, %s47, [#allocation7], 256, 256, 16
    $region17: #{tpu_custom_call.1} parent=1 // pred_fallthru
      _
    // Predicated region
    $region18: #{tpu_custom_call.1} parent=1 // pred_check
      _
    $region19: #{tpu_custom_call.1} parent=1 // pred_check_branch
      %54 = sbr.rel (0) target = $region21
    $region20: #{tpu_custom_call.1} parent=1 // pred_region
      _
    $region21: #{tpu_custom_call.1} parent=1 // pred_fallthru
      _
    // Predicated region
    $region22: #{tpu_custom_call.1} parent=1 // pred_check
      _
    $region23: #{tpu_custom_call.1} parent=1 // pred_check_branch
      %56 = sbr.rel (0) target = $region25
    $region24: #{tpu_custom_call.1} parent=1 // pred_region
      _
    $region25: #{tpu_custom_call.1} parent=1 // pred_fallthru
      _
    // Predicated region
    $region26: #{tpu_custom_call.1} parent=1 // pred_check
      _
    $region27: #{tpu_custom_call.1} parent=1 // pred_check_branch
      %58 = sbr.rel (0) target = $region29
    $region28: #{tpu_custom_call.1} parent=1 // pred_region
      _
    $region29: #{tpu_custom_call.1} parent=1 // pred_fallthru
      _
    // Predicated region
    $region30: #{tpu_custom_call.1} parent=1 // pred_check
      _
    $region31: #{tpu_custom_call.1} parent=1 // pred_check_branch
      %60 = sbr.rel (0) target = $region33
    $region32: #{tpu_custom_call.1} parent=1 // pred_region
      %61 = dma.done [#allocation4], 128
    $region33: #{tpu_custom_call.1} parent=1 // pred_fallthru
      _
    // Predicated region
    $region34: #{tpu_custom_call.1} parent=1 // pred_check
      _
    $region35: #{tpu_custom_call.1} parent=1 // pred_check_branch
      %63 = sbr.rel (0) target = $region37
    $region36: #{tpu_custom_call.1} parent=1 // pred_region
      %64 = dma.done [#allocation7], 512
    $region37: #{tpu_custom_call.1} parent=1 // pred_fallthru
      _
    // Predicated region
    $region38: #{tpu_custom_call.1} parent=1 // pred_check
      _
    $region39: #{tpu_custom_call.1} parent=1 // pred_check_branch
      %66 = sbr.rel (0) target = $region41
    $region40: #{tpu_custom_call.1} parent=1 // pred_region
      %67 = dma.done [#allocation7], 8192
    $region41: #{tpu_custom_call.1} parent=1 // pred_fallthru
      _
    %v68 = vld [vmem:[#allocation3] sm:$0xff]
    %v69 = vld [vmem:[#allocation6] sm:$0xff]
    %v70 = vld [vmem:[#allocation6 + $0x8] sm:$0xff]
    %v71 = vld [vmem:[#allocation6 + $0x10] sm:$0x3]
    %v72 = vld [vmem:[#allocation6 + $0x18] sm:$0x3]
    %v73 = vld [vmem:[%s2] sm:$0x3]
    %v75 = vlaneseq
    %v76 = vshrl.u32 %v75, 7
    %v77 = vsub.s32 0, %v76
    %v78 = vrot.slane %v73, %v77
    %v79 = vlaneseq
    %v80 = vshrl.u32 %v79, 7
    %v81 = vsub.s32 1, %v80
    %v82 = vrot.slane %v73, %v81
    %vm85 = vcmask 80896
    %v87 = vsel %vm85, %v68, 0
    %vm89 = vcmask 1041408
    %v91 = vsel %vm89, %v71, 0
    %v94 = vsel %vm89, %v72, 0
    %96 = vmatprep.subr.mxu0 %v70
    %97 = vmatpush1.msra.mxu0 %v69
    %98 = vmatprep.subr.mxu0 %v94
    %99 = vmatpush1.msra.mxu0 %v91
    %100 = vmatprep.subr.mxu0 0.0
    %101 = vmatpush1.msra.mxu0 0.0
    %102 = vmatprep.subr.mxu0 0.0
    %103 = vmatpush1.msra.mxu0 0.0
    %104 = vmatprep.subr.mxu0 0.0
    %105 = vmatpush1.msra.mxu0 0.0
    %106 = vmatprep.subr.mxu0 0.0
    %107 = vmatpush1.msra.mxu0 0.0
    %108 = vmatprep.subr.mxu0 0.0
    %109 = vmatpush1.msra.mxu0 0.0
    %110 = vmatprep.subr.mxu0 0.0
    %111 = vmatpush1.msra.mxu0 0.0
    %112 = vmatprep.subr.mxu0 0.0
    %113 = vmatpush1.msra.mxu0 0.0
    %114 = vmatprep.subr.mxu0 0.0
    %115 = vmatpush1.msra.mxu0 0.0
    %116 = vmatprep.subr.mxu0 0.0
    %117 = vmatpush1.msra.mxu0 0.0
    %118 = vmatprep.subr.mxu0 0.0
    %119 = vmatpush1.msra.mxu0 0.0
    %120 = vmatprep.subr.mxu0 0.0
    %121 = vmatpush1.msra.mxu0 0.0
    %122 = vmatprep.subr.mxu0 0.0
    %123 = vmatpush1.msra.mxu0 0.0
    %124 = vmatprep.subr.mxu0 0.0
    %125 = vmatpush1.msra.mxu0 0.0
    %126 = vmatprep.subr.mxu0 0.0
    %127 = vmatpush1.msra.mxu0 0.0
    %128 = vmatprep.subr.mxu0 0.0
    %129 = vmatpush1.msra.mxu0 0.0
    %130 = vmatprep.subr.mxu0 0.0
    %131 = vmatpush1.msra.mxu0 0.0
    %132 = vmatprep.subr.mxu0 0.0
    %133 = vmatpush1.msra.mxu0 0.0
    %134 = vmatprep.subr.mxu0 0.0
    %135 = vmatpush1.msra.mxu0 0.0
    %136 = vmatprep.subr.mxu0 0.0
    %137 = vmatpush1.msra.mxu0 0.0
    %138 = vmatprep.subr.mxu0 0.0
    %139 = vmatpush1.msra.mxu0 0.0
    %140 = vmatprep.subr.mxu0 0.0
    %141 = vmatpush1.msra.mxu0 0.0
    %142 = vmatprep.subr.mxu0 0.0
    %143 = vmatpush1.msra.mxu0 0.0
    %144 = vmatprep.subr.mxu0 0.0
    %145 = vmatpush1.msra.mxu0 0.0
    %146 = vmatprep.subr.mxu0 0.0
    %147 = vmatpush1.msra.mxu0 0.0
    %148 = vmatprep.subr.mxu0 0.0
    %149 = vmatpush1.msra.mxu0 0.0
    %150 = vmatprep.subr.mxu0 0.0
    %151 = vmatpush1.msra.mxu0 0.0
    %152 = vmatprep.subr.mxu0 0.0
    %153 = vmatpush1.msra.mxu0 0.0
    %154 = vmatprep.subr.mxu0 0.0
    %155 = vmatpush1.msra.mxu0 0.0
    %156 = vmatprep.subr.mxu0 0.0
    %157 = vmatpush1.msra.mxu0 0.0
    %158 = vmatprep.subr.mxu0 0.0
    %159 = vmatpush1.msra.mxu0 0.0
    %160 = vmatprep.mubr.f32.mxu0 0.0
    %161 = vmatmul.mubr.f32.gmra.mrb[0].mxu0 %v87
    %v162 = vpop.f32.mrb[0].mxu0
    %v163 = vadd.f32 %v78, %v162
    %v164 = vpop.f32.mrb[0].mxu0
    %v165 = vadd.f32 %v82, %v164
    %166 = vdwg.mxu0
    %v167 = vmul.f32 %v163, 0.5
    %v168 = vmul.f32 %v165, 0.5
    %v169 = vmul.f32 %v163, 0.70710677
    %v170 = vmul.f32 %v165, 0.70710677
    %v171 = verf.f32.pop %v169
    %v172 = verf.f32.pop %v170
    %v173 = vadd.f32 %v171, 1.0
    %v174 = vadd.f32 %v172, 1.0
    %v175 = vmul.f32 %v167, %v173
    %v176 = vmul.f32 %v168, %v174
    %v177 = vld [vmem:[#allocation8] sm:$0xff]
    %v178 = vld [vmem:[#allocation8 + $0x8] sm:$0xff]
    %v179 = vld [vmem:[#allocation8 + $0x10] sm:$0xff]
    %v180 = vld [vmem:[#allocation8 + $0x18] sm:$0xff]
    %v181 = vld [vmem:[#allocation8 + $0x20] sm:$0xff]
    %v182 = vld [vmem:[#allocation8 + $0x28] sm:$0xff]
    %v183 = vld [vmem:[#allocation8 + $0x30] sm:$0xff]
    %v184 = vld [vmem:[#allocation8 + $0x38] sm:$0xff]
    %v185 = vld [vmem:[#allocation8 + $0x40] sm:$0xff]
    %v186 = vld [vmem:[#allocation8 + $0x48] sm:$0xff]
    %v187 = vld [vmem:[#allocation8 + $0x50] sm:$0xff]
    %v188 = vld [vmem:[#allocation8 + $0x58] sm:$0xff]
    %v189 = vld [vmem:[#allocation8 + $0x60] sm:$0xff]
    %v190 = vld [vmem:[#allocation8 + $0x68] sm:$0xff]
    %v191 = vld [vmem:[#allocation8 + $0x70] sm:$0xff]
    %v192 = vld [vmem:[#allocation8 + $0x78] sm:$0xff]
    %v193 = vld [vmem:[#allocation8 + $0x80] sm:$0xff]
    %v194 = vld [vmem:[#allocation8 + $0x88] sm:$0xff]
    %v195 = vld [vmem:[#allocation8 + $0x90] sm:$0xff]
    %v196 = vld [vmem:[#allocation8 + $0x98] sm:$0xff]
    %v197 = vld [vmem:[#allocation8 + $0xa0] sm:$0xff]
    %v198 = vld [vmem:[#allocation8 + $0xa8] sm:$0xff]
    %v199 = vld [vmem:[#allocation8 + $0xb0] sm:$0xff]
    %v200 = vld [vmem:[#allocation8 + $0xb8] sm:$0xff]
    %v201 = vld [vmem:[#allocation8 + $0xc0] sm:$0xff]
    %v202 = vld [vmem:[#allocation8 + $0xc8] sm:$0xff]
    %v203 = vld [vmem:[#allocation8 + $0xd0] sm:$0xff]
    %v204 = vld [vmem:[#allocation8 + $0xd8] sm:$0xff]
    %v205 = vld [vmem:[#allocation8 + $0xe0] sm:$0xff]
    %v206 = vld [vmem:[#allocation8 + $0xe8] sm:$0xff]
    %v207 = vld [vmem:[#allocation8 + $0xf0] sm:$0xff]
    %v208 = vld [vmem:[#allocation8 + $0xf8] sm:$0xff]
    %v209 = vld [vmem:[#allocation8 + $0x100] sm:$0xff]
    %v210 = vld [vmem:[#allocation8 + $0x108] sm:$0xff]
    %v211 = vld [vmem:[#allocation8 + $0x110] sm:$0xff]
    %v212 = vld [vmem:[#allocation8 + $0x118] sm:$0xff]
    %v213 = vld [vmem:[#allocation8 + $0x120] sm:$0xff]
    %v214 = vld [vmem:[#allocation8 + $0x128] sm:$0xff]
    %v215 = vld [vmem:[#allocation8 + $0x130] sm:$0xff]
    %v216 = vld [vmem:[#allocation8 + $0x138] sm:$0xff]
    %v217 = vld [vmem:[#allocation8 + $0x140] sm:$0xff]
    %v218 = vld [vmem:[#allocation8 + $0x148] sm:$0xff]
    %v219 = vld [vmem:[#allocation8 + $0x150] sm:$0xff]
    %v220 = vld [vmem:[#allocation8 + $0x158] sm:$0xff]
    %v221 = vld [vmem:[#allocation8 + $0x160] sm:$0xff]
    %v222 = vld [vmem:[#allocation8 + $0x168] sm:$0xff]
    %v223 = vld [vmem:[#allocation8 + $0x170] sm:$0xff]
    %v224 = vld [vmem:[#allocation8 + $0x178] sm:$0xff]
    %v225 = vld [vmem:[#allocation8 + $0x180] sm:$0xff]
    %v226 = vld [vmem:[#allocation8 + $0x188] sm:$0xff]
    %v227 = vld [vmem:[#allocation8 + $0x190] sm:$0xff]
    %v228 = vld [vmem:[#allocation8 + $0x198] sm:$0xff]
    %v229 = vld [vmem:[#allocation8 + $0x1a0] sm:$0xff]
    %v230 = vld [vmem:[#allocation8 + $0x1a8] sm:$0xff]
    %v231 = vld [vmem:[#allocation8 + $0x1b0] sm:$0xff]
    %v232 = vld [vmem:[#allocation8 + $0x1b8] sm:$0xff]
    %v233 = vld [vmem:[#allocation8 + $0x1c0] sm:$0xff]
    %v234 = vld [vmem:[#allocation8 + $0x1c8] sm:$0xff]
    %v235 = vld [vmem:[#allocation8 + $0x1d0] sm:$0xff]
    %v236 = vld [vmem:[#allocation8 + $0x1d8] sm:$0xff]
    %v237 = vld [vmem:[#allocation8 + $0x1e0] sm:$0xff]
    %v238 = vld [vmem:[#allocation8 + $0x1e8] sm:$0xff]
    %v239 = vld [vmem:[#allocation8 + $0x1f0] sm:$0xff]
    %v240 = vld [vmem:[#allocation8 + $0x1f8] sm:$0xff]
    %v241 = vld [vmem:[%s4] sm:$0x3]
    %v243 = vlaneseq
    %v244 = vshrl.u32 %v243, 7
    %v245 = vsub.s32 0, %v244
    %v246 = vrot.slane %v241, %v245
    %v247 = vlaneseq
    %v248 = vshrl.u32 %v247, 7
    %v249 = vsub.s32 1, %v248
    %v250 = vrot.slane %v241, %v249
    %253 = vmatprep.subr.mxu0 %v178
    %254 = vmatpush1.msra.mxu0 %v177
    %255 = vmatprep.subr.mxu0 %v180
    %256 = vmatpush1.msra.mxu0 %v179
    %257 = vmatprep.subr.mxu0 %v182
    %258 = vmatpush1.msra.mxu0 %v181
    %259 = vmatprep.subr.mxu0 %v184
    %260 = vmatpush1.msra.mxu0 %v183
    %261 = vmatprep.subr.mxu0 %v186
    %262 = vmatpush1.msra.mxu0 %v185
    %263 = vmatprep.subr.mxu0 %v188
    %264 = vmatpush1.msra.mxu0 %v187
    %265 = vmatprep.subr.mxu0 %v190
    %266 = vmatpush1.msra.mxu0 %v189
    %267 = vmatprep.subr.mxu0 %v192
    %268 = vmatpush1.msra.mxu0 %v191
    %269 = vmatprep.subr.mxu0 %v194
    %270 = vmatpush1.msra.mxu0 %v193
    %271 = vmatprep.subr.mxu0 %v196
    %272 = vmatpush1.msra.mxu0 %v195
    %273 = vmatprep.subr.mxu0 %v198
    %274 = vmatpush1.msra.mxu0 %v197
    %275 = vmatprep.subr.mxu0 %v200
    %276 = vmatpush1.msra.mxu0 %v199
    %277 = vmatprep.subr.mxu0 %v202
    %278 = vmatpush1.msra.mxu0 %v201
    %279 = vmatprep.subr.mxu0 %v204
    %280 = vmatpush1.msra.mxu0 %v203
    %281 = vmatprep.subr.mxu0 %v206
    %282 = vmatpush1.msra.mxu0 %v205
    %283 = vmatprep.subr.mxu0 %v208
    %284 = vmatpush1.msra.mxu0 %v207
    %285 = vmatprep.subr.mxu0 %v210
    %286 = vmatpush1.msra.mxu0 %v209
    %287 = vmatprep.subr.mxu0 %v212
    %288 = vmatpush1.msra.mxu0 %v211
    %289 = vmatprep.subr.mxu0 %v214
    %290 = vmatpush1.msra.mxu0 %v213
    %291 = vmatprep.subr.mxu0 %v216
    %292 = vmatpush1.msra.mxu0 %v215
    %293 = vmatprep.subr.mxu0 %v218
    %294 = vmatpush1.msra.mxu0 %v217
    %295 = vmatprep.subr.mxu0 %v220
    %296 = vmatpush1.msra.mxu0 %v219
    %297 = vmatprep.subr.mxu0 %v222
    %298 = vmatpush1.msra.mxu0 %v221
    %299 = vmatprep.subr.mxu0 %v224
    %300 = vmatpush1.msra.mxu0 %v223
    %301 = vmatprep.subr.mxu0 %v226
    %302 = vmatpush1.msra.mxu0 %v225
    %303 = vmatprep.subr.mxu0 %v228
    %304 = vmatpush1.msra.mxu0 %v227
    %305 = vmatprep.subr.mxu0 %v230
    %306 = vmatpush1.msra.mxu0 %v229
    %307 = vmatprep.subr.mxu0 %v232
    %308 = vmatpush1.msra.mxu0 %v231
    %309 = vmatprep.subr.mxu0 %v234
    %310 = vmatpush1.msra.mxu0 %v233
    %311 = vmatprep.subr.mxu0 %v236
    %312 = vmatpush1.msra.mxu0 %v235
    %313 = vmatprep.subr.mxu0 %v238
    %314 = vmatpush1.msra.mxu0 %v237
    %315 = vmatprep.subr.mxu0 %v240
    %316 = vmatpush1.msra.mxu0 %v239
    %317 = vmatprep.mubr.f32.mxu0 %v176
    %318 = vmatmul.mubr.f32.gmra.mrb[0].mxu0 %v175
    %v319 = vpop.f32.mrb[0].mxu0
    %v320 = vadd.f32 %v246, %v319
    %v321 = vpop.f32.mrb[0].mxu0
    %v322 = vadd.f32 %v250, %v321
    %323 = vdwg.mxu0
    %v324 = vmul.f32 %v320, 0.5
    %v325 = vmul.f32 %v322, 0.5
    %v326 = vmul.f32 %v320, 0.70710677
    %v327 = vmul.f32 %v322, 0.70710677
    %v328 = verf.f32.pop %v326
    %v329 = verf.f32.pop %v327
    %v330 = vadd.f32 %v328, 1.0
    %v331 = vadd.f32 %v329, 1.0
    %v332 = vmul.f32 %v324, %v330
    %v333 = vmul.f32 %v325, %v331
    %v334 = vld [vmem:[%s5] sm:$0x3]
    %v336 = vlaneseq
    %v337 = vshrl.u32 %v336, 7
    %v338 = vsub.s32 0, %v337
    %v339 = vrot.slane %v334, %v338
    %v340 = vlaneseq
    %v341 = vshrl.u32 %v340, 7
    %v342 = vsub.s32 1, %v341
    %v343 = vrot.slane %v334, %v342
    %v346 = vmul.f32 %v332, %v339
    %v347 = vmul.f32 %v333, %v343
    %v348 = vadd.f32 %v346, %v347
    %349 = vadd.xlane.f32.xlu0 %v348
    %v350 = vpop.xlane.xlu0 %349
    %v351 = vld [vmem:[#allocation2] sm:$0x1]
    %353 = vset.pattern.permute.xlu0 0
    %354 = vperm.xlu0 %353, %v351
    %v355 = vpop.permute.xlu0 %354
    %v357 = vlaneseq
    %v358 = vshrl.u32 %v357, 7
    %v359 = vsub.s32 0, %v358
    %v360 = vrot.slane %v355, %v359
    %v361 = vadd.f32 %v350, %v360
    %v363 = vlaneseq
    %v364 = vand.u32 %v363, 127
    %v365 = vlaneseq
    %v366 = vshrl.u32 %v365, 7
    %v367 = vsub.s32 %v364, %v366
    %v368 = vrot.slane %v361, %v367
    %vm370 = vcmask 57344
    %371 = vst.msk [vmem:[#allocation9] sm:$0x1] %vm370, %v368
    // Predicated region
    $region42: #{tpu_custom_call.1} parent=1 // pred_check
      _
    $region43: #{tpu_custom_call.1} parent=1 // pred_check_branch
      %373 = sbr.rel (0) target = $region45
    $region44: #{tpu_custom_call.1} parent=1 // pred_region
      %s375 = ssub.s32 16, 16
      %376 = vsyncadd [#allocation5], %s375
      %s378 = sshll.u32 [#allocation9], 4
      %s379 = int_to_ptr.vmem [resolvable:$true] %s378
      %381 = dma.vmem_to_hbm [thread:$0]  %s379, 16, %s7, [#allocation5]
    $region45: #{tpu_custom_call.1} parent=1 // pred_fallthru
      _
    // Predicated region
    $region46: #{tpu_custom_call.1} parent=1 // pred_check
      _
    $region47: #{tpu_custom_call.1} parent=1 // pred_check_branch
      %383 = sbr.rel (0) target = $region49
    $region48: #{tpu_custom_call.1} parent=1 // pred_region
      %384 = dma.done [#allocation5], 16
    $region49: #{tpu_custom_call.1} parent=1 // pred_fallthru
      _
    %385 = vsyncpa [#allocation4], 1
    %386 = vsyncpa [#allocation7], 1
    %387 = vsyncpa [#allocation5], 1

</llo_original>
